<compile_context>
chip_gen: v7x
topology: tpu7x:2x2x1
jax: 0.10.0
libtpu: 0.0.40
codegen_flags: <defaults>
</compile_context>

<pallas_src>
import functools

import jax
import jax.numpy as jnp
from jax import lax
from jax.experimental import pallas as pl
from jax.experimental.pallas import tpu as pltpu


def _causal_conv1d_kernel(x_ref, w_ref, b_ref, o_ref, xpad_ref, *, kernel_size, dilation):
    # x_ref   : (NB, Cin, L)        input block, NCL layout (L on lanes)
    # w_ref   : (K, Cin, Cout, 1)   weights, rearranged so w[k, c] is a (Cout, 1) column
    # b_ref   : (Cout, 1)           bias column
    # o_ref   : (NB, Cout, L)       output block, NCL layout
    # xpad_ref: (NB, Cin, L + pad)  VMEM scratch holding the causally left-padded input
    NB, Cin, L = x_ref.shape
    Cout = o_ref.shape[1]
    pad = dilation * (kernel_size - 1)

    # Causal left-padding entirely in VMEM (no HBM-side jnp.pad / extra activation copy).
    if pad > 0:
        xpad_ref[:, :, pl.ds(0, pad)] = jnp.zeros((NB, Cin, pad), xpad_ref.dtype)
    xpad_ref[:, :, pl.ds(pad, L)] = x_ref[...]

    # Whole (tiny) weight tensor read + cast once; taps indexed statically afterwards.
    w_all = w_ref[...].astype(jnp.float32)                                 # (K, Cin, Cout, 1)

    # Seed the accumulator with the bias (saves a separate epilogue add).
    acc = jnp.broadcast_to(b_ref[...].astype(jnp.float32), (NB, Cout, L))  # (NB, Cout, L)

    # Static K*Cin loop of VPU broadcast multiply-adds (MXU would be almost entirely idle at
    # these channel counts); each op is vectorized over (batch, Cout) sublanes and L lanes.
    for k in range(kernel_size):
        xk = xpad_ref[:, :, pl.ds(k * dilation, L)].astype(jnp.float32)    # (NB, Cin, L)
        for c in range(Cin):
            w_kc = w_all[k, c]                                             # (Cout, 1)
            acc = acc + w_kc * xk[:, c:c + 1, :]                           # (NB, Cout, L)

    # Single cast on store.
    o_ref[...] = acc.astype(o_ref.dtype)


def causal_conv1d(x_ncl, weight, bias, *, dilation=1, vmem_budget_bytes=8 << 20):
    """Causal 1-D convolution matching the PyTorch CausalConv1d module.

    x_ncl: (N, Cin, L).  weight: (Cout, Cin, K).  bias: (Cout,).  Returns (N, Cout, L).
    """
    N, Cin, L = x_ncl.shape
    Cout, Cin_w, K = weight.shape
    assert Cin == Cin_w
    pad = dilation * (K - 1)
    itemsize = jnp.dtype(x_ncl.dtype).itemsize

    # Batch-block size: as much work per grid step as fits a conservative VMEM budget
    # (double-buffered input + output blocks plus the padded scratch).  One step for small
    # problems; when N is large the grid axis is "parallel" (megacore-shardable on v7x).
    per_example_bytes = (2 * Cin * L + 2 * Cout * L + Cin * (L + pad)) * itemsize
    nb = max(1, min(N, vmem_budget_bytes // max(per_example_bytes, 1)))
    n_steps = pl.cdiv(N, nb)

    # Weight / bias re-layout (tiny tensors, negligible cost): w_kio1[k, c, o, 0] = weight[o, c, k].
    w_kio1 = jnp.transpose(weight, (2, 1, 0))[..., None]     # (K, Cin, Cout, 1)
    b_col = bias.reshape(Cout, 1)                            # (Cout, 1)

    kernel = functools.partial(_causal_conv1d_kernel, kernel_size=K, dilation=dilation)

    cost = pl.CostEstimate(
        flops=2 * N * Cout * Cin * K * L,
        transcendentals=0,
        bytes_accessed=int(
            (N * Cin * L + N * Cout * L) * itemsize
            + w_kio1.size * jnp.dtype(w_kio1.dtype).itemsize
            + b_col.size * jnp.dtype(b_col.dtype).itemsize),
    )

    return pl.pallas_call(
        kernel,
        out_shape=jax.ShapeDtypeStruct((N, Cout, L), x_ncl.dtype),
        grid_spec=pltpu.PrefetchScalarGridSpec(
            num_scalar_prefetch=0,
            grid=(n_steps,),
            in_specs=[
                pl.BlockSpec((nb, Cin, L), lambda i: (i, 0, 0)),
                pl.BlockSpec((K, Cin, Cout, 1), lambda i: (0, 0, 0, 0)),   # resident weights
                pl.BlockSpec((Cout, 1), lambda i: (0, 0)),                 # resident bias
            ],
            out_specs=pl.BlockSpec((nb, Cout, L), lambda i: (i, 0, 0)),
            scratch_shapes=[pltpu.VMEM((nb, Cin, L + pad), x_ncl.dtype)],
        ),
        compiler_params=pltpu.CompilerParams(dimension_semantics=("parallel",)),
        cost_estimate=cost,
    )(x_ncl, w_kio1, b_col)


def _reference_causal_conv1d(x_ncl, weight, bias, *, dilation=1):
    """Plain-JAX reference matching PyTorch Conv1d + trailing-pad trim."""
    K = weight.shape[-1]
    pad = dilation * (K - 1)
    y = lax.conv_general_dilated(
        x_ncl, weight,
        window_strides=(1,),
        padding=[(pad, pad)],
        rhs_dilation=(dilation,),
        dimension_numbers=("NCH", "OIH", "NCH"),
    )
    if pad > 0:
        y = y[..., :-pad]
    return y + bias[None, :, None]


if __name__ == "__main__":
    # Module config: CausalConv1d(in_size=4, out_size=8, kernel_size=3, dilation=2, bias=True)
    N, Cin, L = 2, 4, 16
    Cout, K, dilation = 8, 3, 2

    key = jax.random.PRNGKey(0)
    kx, kw, kb = jax.random.split(key, 3)
    x = jax.random.normal(kx, (N, Cin, L), dtype=jnp.float32)
    # Deterministic parameter init (matches nn.Conv1d shapes: weight (Cout, Cin, K), bias (Cout,)).
    bound = 1.0 / (Cin * K) ** 0.5
    weight = jax.random.uniform(kw, (Cout, Cin, K), minval=-bound, maxval=bound, dtype=jnp.float32)
    bias = jax.random.uniform(kb, (Cout,), minval=-bound, maxval=bound, dtype=jnp.float32)

    y = causal_conv1d(x, weight, bias, dilation=dilation)
    y = jax.block_until_ready(y)

    y_ref = _reference_causal_conv1d(x, weight, bias, dilation=dilation)
    assert y.shape == (N, Cout, L)
    assert jnp.allclose(y, y_ref, atol=1e-5, rtol=1e-5)

    print("KERNEL_OK")
</pallas_src>

<mosaic_0001>
module attributes {stable_mosaic.version = 11 : i64} {
  func.func @_causal_conv1d_kernel(%arg0: i32, %arg1: memref<2x4x16xf32, #tpu.memory_space<vmem>>, %arg2: memref<3x4x8x1xf32, #tpu.memory_space<vmem>>, %arg3: memref<8x1xf32, #tpu.memory_space<vmem>>, %arg4: memref<2x8x16xf32, #tpu.memory_space<vmem>>, %arg5: memref<2x4x20xf32, #tpu.memory_space<vmem>>) attributes {dimension_semantics = [#tpu.dimension_semantics<parallel>], iteration_bounds = array<i64: 1>, scalar_prefetch = 0 : i64, scratch_operands = 1 : i64, tpu.core_type = #tpu.core_type<tc>, window_params = [{transform_indices = @transform_0, window_bounds = array<i64: 2, 4, 16>}, {pipeline_mode = #tpu.pipeline_mode<synchronous>, transform_indices = @transform_1, window_bounds = array<i64: 3, 4, 8, 1>}, {pipeline_mode = #tpu.pipeline_mode<synchronous>, transform_indices = @transform_2, window_bounds = array<i64: 8, 1>}, {transform_indices = @transform_3, window_bounds = array<i64: 2, 8, 16>}]} {
    %cst = arith.constant 0.000000e+00 : f32
    %0 = vector.broadcast %cst : f32 to vector<2x4x4xf32>
    %c0 = arith.constant 0 : index
    %c0_0 = arith.constant 0 : index
    %c0_1 = arith.constant 0 : index
    %1 = vector.load %arg5[%c0, %c0_0, %c0_1] : memref<2x4x20xf32, #tpu.memory_space<vmem>>, vector<2x4x4xf32>
    tpu.vector_store %arg5[%c0, %c0_0, %c0_1], %0 {strides = array<i32>} : memref<2x4x20xf32, #tpu.memory_space<vmem>>, vector<2x4x4xf32>,
    %c0_2 = arith.constant 0 : index
    %c0_3 = arith.constant 0 : index
    %c0_4 = arith.constant 0 : index
    %2 = vector.load %arg1[%c0_2, %c0_3, %c0_4] : memref<2x4x16xf32, #tpu.memory_space<vmem>>, vector<2x4x16xf32>
    %c0_5 = arith.constant 0 : index
    %c0_6 = arith.constant 0 : index
    %c4 = arith.constant 4 : index
    %3 = vector.load %arg5[%c0_5, %c0_6, %c4] : memref<2x4x20xf32, #tpu.memory_space<vmem>>, vector<2x4x16xf32>
    tpu.vector_store %arg5[%c0_5, %c0_6, %c4], %2 {strides = array<i32>} : memref<2x4x20xf32, #tpu.memory_space<vmem>>, vector<2x4x16xf32>,
    %c0_7 = arith.constant 0 : index
    %c0_8 = arith.constant 0 : index
    %c0_9 = arith.constant 0 : index
    %c0_10 = arith.constant 0 : index
    %4 = vector.load %arg2[%c0_7, %c0_8, %c0_9, %c0_10] : memref<3x4x8x1xf32, #tpu.memory_space<vmem>>, vector<3x4x8x1xf32>
    %c0_11 = arith.constant 0 : index
    %c0_12 = arith.constant 0 : index
    %5 = vector.load %arg3[%c0_11, %c0_12] : memref<8x1xf32, #tpu.memory_space<vmem>>, vector<8x1xf32>
    %6 = vector.shape_cast %5 : vector<8x1xf32> to vector<1x8x1xf32>
    %7 = vector.broadcast %6 : vector<1x8x1xf32> to vector<2x8x16xf32>
    %c0_13 = arith.constant 0 : index
    %c0_14 = arith.constant 0 : index
    %c0_15 = arith.constant 0 : index
    %8 = vector.load %arg5[%c0_13, %c0_14, %c0_15] : memref<2x4x20xf32, #tpu.memory_space<vmem>>, vector<2x4x16xf32>
    %9 = vector.extract_strided_slice %4 {offsets = [0, 0, 0, 0], sizes = [1, 1, 8, 1], strides = [1, 1, 1, 1]} : vector<3x4x8x1xf32> to vector<1x1x8x1xf32>
    %10 = vector.shape_cast %9 : vector<1x1x8x1xf32> to vector<8x1xf32>
    %11 = vector.extract_strided_slice %8 {offsets = [0, 0, 0], sizes = [2, 1, 16], strides = [1, 1, 1]} : vector<2x4x16xf32> to vector<2x1x16xf32>
    %12 = vector.shape_cast %10 : vector<8x1xf32> to vector<1x8x1xf32>
    %13 = vector.broadcast %12 : vector<1x8x1xf32> to vector<2x8x16xf32>
    %14 = vector.broadcast %11 : vector<2x1x16xf32> to vector<2x8x16xf32>
    %15 = arith.mulf %13, %14 : vector<2x8x16xf32>
    %16 = arith.addf %7, %15 : vector<2x8x16xf32>
    %17 = vector.extract_strided_slice %4 {offsets = [0, 1, 0, 0], sizes = [1, 1, 8, 1], strides = [1, 1, 1, 1]} : vector<3x4x8x1xf32> to vector<1x1x8x1xf32>
    %18 = vector.shape_cast %17 : vector<1x1x8x1xf32> to vector<8x1xf32>
    %19 = vector.extract_strided_slice %8 {offsets = [0, 1, 0], sizes = [2, 1, 16], strides = [1, 1, 1]} : vector<2x4x16xf32> to vector<2x1x16xf32>
    %20 = vector.shape_cast %18 : vector<8x1xf32> to vector<1x8x1xf32>
    %21 = vector.broadcast %20 : vector<1x8x1xf32> to vector<2x8x16xf32>
    %22 = vector.broadcast %19 : vector<2x1x16xf32> to vector<2x8x16xf32>
    %23 = arith.mulf %21, %22 : vector<2x8x16xf32>
    %24 = arith.addf %16, %23 : vector<2x8x16xf32>
    %25 = vector.extract_strided_slice %4 {offsets = [0, 2, 0, 0], sizes = [1, 1, 8, 1], strides = [1, 1, 1, 1]} : vector<3x4x8x1xf32> to vector<1x1x8x1xf32>
    %26 = vector.shape_cast %25 : vector<1x1x8x1xf32> to vector<8x1xf32>
    %27 = vector.extract_strided_slice %8 {offsets = [0, 2, 0], sizes = [2, 1, 16], strides = [1, 1, 1]} : vector<2x4x16xf32> to vector<2x1x16xf32>
    %28 = vector.shape_cast %26 : vector<8x1xf32> to vector<1x8x1xf32>
    %29 = vector.broadcast %28 : vector<1x8x1xf32> to vector<2x8x16xf32>
    %30 = vector.broadcast %27 : vector<2x1x16xf32> to vector<2x8x16xf32>
    %31 = arith.mulf %29, %30 : vector<2x8x16xf32>
    %32 = arith.addf %24, %31 : vector<2x8x16xf32>
    %33 = vector.extract_strided_slice %4 {offsets = [0, 3, 0, 0], sizes = [1, 1, 8, 1], strides = [1, 1, 1, 1]} : vector<3x4x8x1xf32> to vector<1x1x8x1xf32>
    %34 = vector.shape_cast %33 : vector<1x1x8x1xf32> to vector<8x1xf32>
    %35 = vector.extract_strided_slice %8 {offsets = [0, 3, 0], sizes = [2, 1, 16], strides = [1, 1, 1]} : vector<2x4x16xf32> to vector<2x1x16xf32>
    %36 = vector.shape_cast %34 : vector<8x1xf32> to vector<1x8x1xf32>
    %37 = vector.broadcast %36 : vector<1x8x1xf32> to vector<2x8x16xf32>
    %38 = vector.broadcast %35 : vector<2x1x16xf32> to vector<2x8x16xf32>
    %39 = arith.mulf %37, %38 : vector<2x8x16xf32>
    %40 = arith.addf %32, %39 : vector<2x8x16xf32>
    %c0_16 = arith.constant 0 : index
    %c0_17 = arith.constant 0 : index
    %c2 = arith.constant 2 : index
    %41 = vector.load %arg5[%c0_16, %c0_17, %c2] : memref<2x4x20xf32, #tpu.memory_space<vmem>>, vector<2x4x16xf32>
    %42 = vector.extract_strided_slice %4 {offsets = [1, 0, 0, 0], sizes = [1, 1, 8, 1], strides = [1, 1, 1, 1]} : vector<3x4x8x1xf32> to vector<1x1x8x1xf32>
    %43 = vector.shape_cast %42 : vector<1x1x8x1xf32> to vector<8x1xf32>
    %44 = vector.extract_strided_slice %41 {offsets = [0, 0, 0], sizes = [2, 1, 16], strides = [1, 1, 1]} : vector<2x4x16xf32> to vector<2x1x16xf32>
    %45 = vector.shape_cast %43 : vector<8x1xf32> to vector<1x8x1xf32>
    %46 = vector.broadcast %45 : vector<1x8x1xf32> to vector<2x8x16xf32>
    %47 = vector.broadcast %44 : vector<2x1x16xf32> to vector<2x8x16xf32>
    %48 = arith.mulf %46, %47 : vector<2x8x16xf32>
    %49 = arith.addf %40, %48 : vector<2x8x16xf32>
    %50 = vector.extract_strided_slice %4 {offsets = [1, 1, 0, 0], sizes = [1, 1, 8, 1], strides = [1, 1, 1, 1]} : vector<3x4x8x1xf32> to vector<1x1x8x1xf32>
    %51 = vector.shape_cast %50 : vector<1x1x8x1xf32> to vector<8x1xf32>
    %52 = vector.extract_strided_slice %41 {offsets = [0, 1, 0], sizes = [2, 1, 16], strides = [1, 1, 1]} : vector<2x4x16xf32> to vector<2x1x16xf32>
    %53 = vector.shape_cast %51 : vector<8x1xf32> to vector<1x8x1xf32>
    %54 = vector.broadcast %53 : vector<1x8x1xf32> to vector<2x8x16xf32>
    %55 = vector.broadcast %52 : vector<2x1x16xf32> to vector<2x8x16xf32>
    %56 = arith.mulf %54, %55 : vector<2x8x16xf32>
    %57 = arith.addf %49, %56 : vector<2x8x16xf32>
    %58 = vector.extract_strided_slice %4 {offsets = [1, 2, 0, 0], sizes = [1, 1, 8, 1], strides = [1, 1, 1, 1]} : vector<3x4x8x1xf32> to vector<1x1x8x1xf32>
    %59 = vector.shape_cast %58 : vector<1x1x8x1xf32> to vector<8x1xf32>
    %60 = vector.extract_strided_slice %41 {offsets = [0, 2, 0], sizes = [2, 1, 16], strides = [1, 1, 1]} : vector<2x4x16xf32> to vector<2x1x16xf32>
    %61 = vector.shape_cast %59 : vector<8x1xf32> to vector<1x8x1xf32>
    %62 = vector.broadcast %61 : vector<1x8x1xf32> to vector<2x8x16xf32>
    %63 = vector.broadcast %60 : vector<2x1x16xf32> to vector<2x8x16xf32>
    %64 = arith.mulf %62, %63 : vector<2x8x16xf32>
    %65 = arith.addf %57, %64 : vector<2x8x16xf32>
    %66 = vector.extract_strided_slice %4 {offsets = [1, 3, 0, 0], sizes = [1, 1, 8, 1], strides = [1, 1, 1, 1]} : vector<3x4x8x1xf32> to vector<1x1x8x1xf32>
    %67 = vector.shape_cast %66 : vector<1x1x8x1xf32> to vector<8x1xf32>
    %68 = vector.extract_strided_slice %41 {offsets = [0, 3, 0], sizes = [2, 1, 16], strides = [1, 1, 1]} : vector<2x4x16xf32> to vector<2x1x16xf32>
    %69 = vector.shape_cast %67 : vector<8x1xf32> to vector<1x8x1xf32>
    %70 = vector.broadcast %69 : vector<1x8x1xf32> to vector<2x8x16xf32>
    %71 = vector.broadcast %68 : vector<2x1x16xf32> to vector<2x8x16xf32>
    %72 = arith.mulf %70, %71 : vector<2x8x16xf32>
    %73 = arith.addf %65, %72 : vector<2x8x16xf32>
    %c0_18 = arith.constant 0 : index
    %c0_19 = arith.constant 0 : index
    %c4_20 = arith.constant 4 : index
    %74 = vector.load %arg5[%c0_18, %c0_19, %c4_20] : memref<2x4x20xf32, #tpu.memory_space<vmem>>, vector<2x4x16xf32>
    %75 = vector.extract_strided_slice %4 {offsets = [2, 0, 0, 0], sizes = [1, 1, 8, 1], strides = [1, 1, 1, 1]} : vector<3x4x8x1xf32> to vector<1x1x8x1xf32>
    %76 = vector.shape_cast %75 : vector<1x1x8x1xf32> to vector<8x1xf32>
    %77 = vector.extract_strided_slice %74 {offsets = [0, 0, 0], sizes = [2, 1, 16], strides = [1, 1, 1]} : vector<2x4x16xf32> to vector<2x1x16xf32>
    %78 = vector.shape_cast %76 : vector<8x1xf32> to vector<1x8x1xf32>
    %79 = vector.broadcast %78 : vector<1x8x1xf32> to vector<2x8x16xf32>
    %80 = vector.broadcast %77 : vector<2x1x16xf32> to vector<2x8x16xf32>
    %81 = arith.mulf %79, %80 : vector<2x8x16xf32>
    %82 = arith.addf %73, %81 : vector<2x8x16xf32>
    %83 = vector.extract_strided_slice %4 {offsets = [2, 1, 0, 0], sizes = [1, 1, 8, 1], strides = [1, 1, 1, 1]} : vector<3x4x8x1xf32> to vector<1x1x8x1xf32>
    %84 = vector.shape_cast %83 : vector<1x1x8x1xf32> to vector<8x1xf32>
    %85 = vector.extract_strided_slice %74 {offsets = [0, 1, 0], sizes = [2, 1, 16], strides = [1, 1, 1]} : vector<2x4x16xf32> to vector<2x1x16xf32>
    %86 = vector.shape_cast %84 : vector<8x1xf32> to vector<1x8x1xf32>
    %87 = vector.broadcast %86 : vector<1x8x1xf32> to vector<2x8x16xf32>
    %88 = vector.broadcast %85 : vector<2x1x16xf32> to vector<2x8x16xf32>
    %89 = arith.mulf %87, %88 : vector<2x8x16xf32>
    %90 = arith.addf %82, %89 : vector<2x8x16xf32>
    %91 = vector.extract_strided_slice %4 {offsets = [2, 2, 0, 0], sizes = [1, 1, 8, 1], strides = [1, 1, 1, 1]} : vector<3x4x8x1xf32> to vector<1x1x8x1xf32>
    %92 = vector.shape_cast %91 : vector<1x1x8x1xf32> to vector<8x1xf32>
    %93 = vector.extract_strided_slice %74 {offsets = [0, 2, 0], sizes = [2, 1, 16], strides = [1, 1, 1]} : vector<2x4x16xf32> to vector<2x1x16xf32>
    %94 = vector.shape_cast %92 : vector<8x1xf32> to vector<1x8x1xf32>
    %95 = vector.broadcast %94 : vector<1x8x1xf32> to vector<2x8x16xf32>
    %96 = vector.broadcast %93 : vector<2x1x16xf32> to vector<2x8x16xf32>
    %97 = arith.mulf %95, %96 : vector<2x8x16xf32>
    %98 = arith.addf %90, %97 : vector<2x8x16xf32>
    %99 = vector.extract_strided_slice %4 {offsets = [2, 3, 0, 0], sizes = [1, 1, 8, 1], strides = [1, 1, 1, 1]} : vector<3x4x8x1xf32> to vector<1x1x8x1xf32>
    %100 = vector.shape_cast %99 : vector<1x1x8x1xf32> to vector<8x1xf32>
    %101 = vector.extract_strided_slice %74 {offsets = [0, 3, 0], sizes = [2, 1, 16], strides = [1, 1, 1]} : vector<2x4x16xf32> to vector<2x1x16xf32>
    %102 = vector.shape_cast %100 : vector<8x1xf32> to vector<1x8x1xf32>
    %103 = vector.broadcast %102 : vector<1x8x1xf32> to vector<2x8x16xf32>
    %104 = vector.broadcast %101 : vector<2x1x16xf32> to vector<2x8x16xf32>
    %105 = arith.mulf %103, %104 : vector<2x8x16xf32>
    %106 = arith.addf %98, %105 : vector<2x8x16xf32>
    %c0_21 = arith.constant 0 : index
    %c0_22 = arith.constant 0 : index
    %c0_23 = arith.constant 0 : index
    %107 = vector.load %arg4[%c0_21, %c0_22, %c0_23] : memref<2x8x16xf32, #tpu.memory_space<vmem>>, vector<2x8x16xf32>
    tpu.vector_store %arg4[%c0_21, %c0_22, %c0_23], %106 {strides = array<i32>} : memref<2x8x16xf32, #tpu.memory_space<vmem>>, vector<2x8x16xf32>,
    return
  }
  func.func @transform_0(%arg0: i32) -> (i32, i32, i32) {
    %c0_i32 = arith.constant 0 : i32
    %c0_i32_0 = arith.constant 0 : i32
    %c0_i32_1 = arith.constant 0 : i32
    return %arg0, %c0_i32, %c0_i32_0 : i32, i32, i32
  }
  func.func @transform_1(%arg0: i32) -> (i32, i32, i32, i32) {
    %c0_i32 = arith.constant 0 : i32
    %c0_i32_0 = arith.constant 0 : i32
    %c0_i32_1 = arith.constant 0 : i32
    %c0_i32_2 = arith.constant 0 : i32
    %c0_i32_3 = arith.constant 0 : i32
    return %c0_i32, %c0_i32_0, %c0_i32_1, %c0_i32_2 : i32, i32, i32, i32
  }
  func.func @transform_2(%arg0: i32) -> (i32, i32) {
    %c0_i32 = arith.constant 0 : i32
    %c0_i32_0 = arith.constant 0 : i32
    %c0_i32_1 = arith.constant 0 : i32
    return %c0_i32, %c0_i32_0 : i32, i32
  }
  func.func @transform_3(%arg0: i32) -> (i32, i32, i32) {
    %c0_i32 = arith.constant 0 : i32
    %c0_i32_0 = arith.constant 0 : i32
    %c0_i32_1 = arith.constant 0 : i32
    return %arg0, %c0_i32, %c0_i32_0 : i32, i32, i32
  }
}

</mosaic_0001>

<llo_original>
// kernel: tpu_custom_call.1
$region0: #{tpu_custom_call.1}
  #allocation0 [shape = 'u32[]', space=smem, size = 0x4, offset = 0x4, fixed_abs, tag = 'smem constant byte address 0x4 - core index']
  #allocation1 [shape = 'u32[144,128]{1,0:T(1,128)}', space=vmem, size = 0x12000, scoped, tag = 'internal scratch']
  #allocation2 [shape = 'f32[2,4,20]{2,1,0:T(4,128)}', space=vmem, size = 0x1000, scoped, tag = 'scratch operand']
  %s0 = inlined_call_operand.vmem [shape: f32[2,4,16], index: 0, kind: input, shape index: {}]
  %s1 = inlined_call_operand.vmem [shape: f32[3,4,8,1], index: 1, kind: input, shape index: {}]
  %s2 = inlined_call_operand.vmem [shape: f32[8,1], index: 2, kind: input, shape index: {}]
  %s3 = inlined_call_operand.hbm [shape: f32[2,8,16], index: 3, kind: output, shape index: {}]
  %s4 = sld [smem:[#allocation0]]
  $region22: #{tpu_custom_call.1} parent=0
    _
  %s6 = ssub.s32 1, %s4
  %s7 = scalar_select 0, %s6, %s4
  $region1: #{tpu_custom_call.1} parent=0
    #allocation3 [shape = 'u8[8192]{0}', space=vmem, size = 0x2000, scoped, tag = 'output window, operand 0, single buffered']
    #allocation4 [shape = 's32[1]{0}', space=sflag, size = 0x4, scoped, tag = 'scoped memory for tpu_custom_call.1']
    %8 = vsyncpa [#allocation4], 0
    // Predicated region
    $region2: #{tpu_custom_call.1} parent=1 // pred_check
      _
    $region3: #{tpu_custom_call.1} parent=1 // pred_check_branch
      %10 = sbr.rel (0) target = $region5
    $region4: #{tpu_custom_call.1} parent=1 // pred_region
      _
    $region5: #{tpu_custom_call.1} parent=1 // pred_fallthru
      _
    // Predicated region
    $region6: #{tpu_custom_call.1} parent=1 // pred_check
      _
    $region7: #{tpu_custom_call.1} parent=1 // pred_check_branch
      %12 = sbr.rel (0) target = $region9
    $region8: #{tpu_custom_call.1} parent=1 // pred_region
      _
    $region9: #{tpu_custom_call.1} parent=1 // pred_fallthru
      _
    // Predicated region
    $region10: #{tpu_custom_call.1} parent=1 // pred_check
      _
    $region11: #{tpu_custom_call.1} parent=1 // pred_check_branch
      %14 = sbr.rel (0) target = $region13
    $region12: #{tpu_custom_call.1} parent=1 // pred_region
      _
    $region13: #{tpu_custom_call.1} parent=1 // pred_fallthru
      _
    %vm15 = vcmask 27648
    %16 = vst.msk [vmem:[#allocation2] sm:$0xf] %vm15, 0.0
    %17 = vst.msk [vmem:[#allocation2 + $0x4] sm:$0xf] %vm15, 0.0
    %v18 = vld [vmem:[%s0] sm:$0xf]
    %v19 = vld [vmem:[%s0 + $0x4] sm:$0xf]
    %22 = vrot.lane.b32.xlu0 %v18, 4
    %v23 = vpop.permute.xlu0 %22
    %24 = vrot.lane.b32.xlu0 %v19, 4
    %v25 = vpop.permute.xlu0 %24
    %vm28 = vcmask 158752
    %29 = vst.msk [vmem:[#allocation2] sm:$0xf] %vm28, %v23
    %30 = vst.msk [vmem:[#allocation2 + $0x4] sm:$0xf] %vm28, %v25
    %v31 = vld [vmem:[%s1] sm:$0xff]
    %v32 = vld [vmem:[%s1 + $0x8] sm:$0xff]
    %v33 = vld [vmem:[%s1 + $0x10] sm:$0xff]
    %v34 = vld [vmem:[%s1 + $0x18] sm:$0xff]
    %v35 = vld [vmem:[%s1 + $0x20] sm:$0xff]
    %v36 = vld [vmem:[%s1 + $0x28] sm:$0xff]
    %v37 = vld [vmem:[%s1 + $0x30] sm:$0xff]
    %v38 = vld [vmem:[%s1 + $0x38] sm:$0xff]
    %v39 = vld [vmem:[%s1 + $0x40] sm:$0xff]
    %v40 = vld [vmem:[%s1 + $0x48] sm:$0xff]
    %v41 = vld [vmem:[%s1 + $0x50] sm:$0xff]
    %v42 = vld [vmem:[%s1 + $0x58] sm:$0xff]
    %v43 = vld [vmem:[%s2] sm:$0xff]
    %45 = vset.pattern.permute.xlu0 0
    %46 = vperm.xlu0 %45, %v43
    %v47 = vpop.permute.xlu0 %46
    %v49 = vld [vmem:[#allocation2] sm:$0xf]
    %v50 = vld [vmem:[#allocation2 + $0x4] sm:$0xf]
    %52 = vset.pattern.permute.xlu0 0
    %53 = vperm.xlu0 %52, %v31
    %v54 = vpop.permute.xlu0 %53
    %v56 = vlaneseq
    %v57 = vshrl.u32 %v56, 7
    %v58 = vsub.s32 0, %v57
    %v59 = vrot.slane %v49, %v58
    %v60 = vlaneseq
    %v61 = vshrl.u32 %v60, 7
    %v62 = vsub.s32 0, %v61
    %v63 = vrot.slane %v50, %v62
    %v64 = vmul.f32 %v54, %v59
    %v65 = vmul.f32 %v54, %v63
    %v66 = vadd.f32 %v47, %v64
    %v67 = vadd.f32 %v47, %v65
    %69 = vset.pattern.permute.xlu0 0
    %70 = vperm.xlu0 %69, %v32
    %v71 = vpop.permute.xlu0 %70
    %v73 = vlaneseq
    %v74 = vshrl.u32 %v73, 7
    %v75 = vsub.s32 1, %v74
    %v76 = vrot.slane %v49, %v75
    %v77 = vlaneseq
    %v78 = vshrl.u32 %v77, 7
    %v79 = vsub.s32 1, %v78
    %v80 = vrot.slane %v50, %v79
    %v81 = vmul.f32 %v71, %v76
    %v82 = vmul.f32 %v71, %v80
    %v83 = vadd.f32 %v66, %v81
    %v84 = vadd.f32 %v67, %v82
    %86 = vset.pattern.permute.xlu0 0
    %87 = vperm.xlu0 %86, %v33
    %v88 = vpop.permute.xlu0 %87
    %v90 = vlaneseq
    %v91 = vshrl.u32 %v90, 7
    %v92 = vsub.s32 2, %v91
    %v93 = vrot.slane %v49, %v92
    %v94 = vlaneseq
    %v95 = vshrl.u32 %v94, 7
    %v96 = vsub.s32 2, %v95
    %v97 = vrot.slane %v50, %v96
    %v98 = vmul.f32 %v88, %v93
    %v99 = vmul.f32 %v88, %v97
    %v100 = vadd.f32 %v83, %v98
    %v101 = vadd.f32 %v84, %v99
    %103 = vset.pattern.permute.xlu0 0
    %104 = vperm.xlu0 %103, %v34
    %v105 = vpop.permute.xlu0 %104
    %v107 = vlaneseq
    %v108 = vshrl.u32 %v107, 7
    %v109 = vsub.s32 3, %v108
    %v110 = vrot.slane %v49, %v109
    %v111 = vlaneseq
    %v112 = vshrl.u32 %v111, 7
    %v113 = vsub.s32 3, %v112
    %v114 = vrot.slane %v50, %v113
    %v115 = vmul.f32 %v105, %v110
    %v116 = vmul.f32 %v105, %v114
    %v117 = vadd.f32 %v100, %v115
    %v118 = vadd.f32 %v101, %v116
    %120 = vset.pattern.permute.xlu0 0
    %121 = vperm.xlu0 %120, %v35
    %v122 = vpop.permute.xlu0 %121
    %v124 = vmul.f32 %v122, %v59
    %v125 = vmul.f32 %v122, %v63
    %128 = vrot.lane.b32.xlu0 %v124, 126
    %v129 = vpop.permute.xlu0 %128
    %130 = vrot.lane.b32.xlu0 %v125, 126
    %v131 = vpop.permute.xlu0 %130
    %v134 = vadd.f32 %v117, %v129
    %v135 = vadd.f32 %v118, %v131
    %137 = vset.pattern.permute.xlu0 0
    %138 = vperm.xlu0 %137, %v36
    %v139 = vpop.permute.xlu0 %138
    %v141 = vmul.f32 %v139, %v76
    %v142 = vmul.f32 %v139, %v80
    %145 = vrot.lane.b32.xlu0 %v141, 126
    %v146 = vpop.permute.xlu0 %145
    %147 = vrot.lane.b32.xlu0 %v142, 126
    %v148 = vpop.permute.xlu0 %147
    %v151 = vadd.f32 %v134, %v146
    %v152 = vadd.f32 %v135, %v148
    %154 = vset.pattern.permute.xlu0 0
    %155 = vperm.xlu0 %154, %v37
    %v156 = vpop.permute.xlu0 %155
    %v158 = vmul.f32 %v156, %v93
    %v159 = vmul.f32 %v156, %v97
    %162 = vrot.lane.b32.xlu0 %v158, 126
    %v163 = vpop.permute.xlu0 %162
    %164 = vrot.lane.b32.xlu0 %v159, 126
    %v165 = vpop.permute.xlu0 %164
    %v168 = vadd.f32 %v151, %v163
    %v169 = vadd.f32 %v152, %v165
    %171 = vset.pattern.permute.xlu0 0
    %172 = vperm.xlu0 %171, %v38
    %v173 = vpop.permute.xlu0 %172
    %v175 = vmul.f32 %v173, %v110
    %v176 = vmul.f32 %v173, %v114
    %179 = vrot.lane.b32.xlu0 %v175, 126
    %v180 = vpop.permute.xlu0 %179
    %181 = vrot.lane.b32.xlu0 %v176, 126
    %v182 = vpop.permute.xlu0 %181
    %v185 = vadd.f32 %v168, %v180
    %v186 = vadd.f32 %v169, %v182
    %188 = vset.pattern.permute.xlu0 0
    %189 = vperm.xlu0 %188, %v39
    %v190 = vpop.permute.xlu0 %189
    %v192 = vmul.f32 %v190, %v59
    %v193 = vmul.f32 %v190, %v63
    %196 = vrot.lane.b32.xlu0 %v192, 124
    %v197 = vpop.permute.xlu0 %196
    %198 = vrot.lane.b32.xlu0 %v193, 124
    %v199 = vpop.permute.xlu0 %198
    %v202 = vadd.f32 %v185, %v197
    %v203 = vadd.f32 %v186, %v199
    %205 = vset.pattern.permute.xlu0 0
    %206 = vperm.xlu0 %205, %v40
    %v207 = vpop.permute.xlu0 %206
    %v209 = vmul.f32 %v207, %v76
    %v210 = vmul.f32 %v207, %v80
    %213 = vrot.lane.b32.xlu0 %v209, 124
    %v214 = vpop.permute.xlu0 %213
    %215 = vrot.lane.b32.xlu0 %v210, 124
    %v216 = vpop.permute.xlu0 %215
    %v219 = vadd.f32 %v202, %v214
    %v220 = vadd.f32 %v203, %v216
    %222 = vset.pattern.permute.xlu0 0
    %223 = vperm.xlu0 %222, %v41
    %v224 = vpop.permute.xlu0 %223
    %v226 = vmul.f32 %v224, %v93
    %v227 = vmul.f32 %v224, %v97
    %230 = vrot.lane.b32.xlu0 %v226, 124
    %v231 = vpop.permute.xlu0 %230
    %232 = vrot.lane.b32.xlu0 %v227, 124
    %v233 = vpop.permute.xlu0 %232
    %v236 = vadd.f32 %v219, %v231
    %v237 = vadd.f32 %v220, %v233
    %239 = vset.pattern.permute.xlu0 0
    %240 = vperm.xlu0 %239, %v42
    %v241 = vpop.permute.xlu0 %240
    %v243 = vmul.f32 %v241, %v110
    %v244 = vmul.f32 %v241, %v114
    %247 = vrot.lane.b32.xlu0 %v243, 124
    %v248 = vpop.permute.xlu0 %247
    %249 = vrot.lane.b32.xlu0 %v244, 124
    %v250 = vpop.permute.xlu0 %249
    %v253 = vadd.f32 %v236, %v248
    %v254 = vadd.f32 %v237, %v250
    %vm255 = vcmask 130048
    %256 = vst.msk [vmem:[#allocation3] sm:$0xff] %vm255, %v253
    %257 = vst.msk [vmem:[#allocation3 + $0x8] sm:$0xff] %vm255, %v254
    // Predicated region
    $region14: #{tpu_custom_call.1} parent=1 // pred_check
      _
    $region15: #{tpu_custom_call.1} parent=1 // pred_check_branch
      %259 = sbr.rel (0) target = $region17
    $region16: #{tpu_custom_call.1} parent=1 // pred_region
      %s261 = ssub.s32 256, 256
      %262 = vsyncadd [#allocation4], %s261
      %s263 = sshll.u32 [#allocation3], 4
      %s264 = int_to_ptr.vmem [resolvable:$true] %s263
      %269 = dma.vmem_to_hbm [thread:$0]  %s264, 256, %s3, [#allocation4], 128, 128, 8
    $region17: #{tpu_custom_call.1} parent=1 // pred_fallthru
      _
    // Predicated region
    $region18: #{tpu_custom_call.1} parent=1 // pred_check
      _
    $region19: #{tpu_custom_call.1} parent=1 // pred_check_branch
      %271 = sbr.rel (0) target = $region21
    $region20: #{tpu_custom_call.1} parent=1 // pred_region
      %272 = dma.done [#allocation4], 256
    $region21: #{tpu_custom_call.1} parent=1 // pred_fallthru
      _
    %273 = vsyncpa [#allocation4], 1

</llo_original>
